<compile_context>
chip_gen: v7x
topology: tpu7x:2x2x1
jax: 0.10.0
libtpu: 0.0.40
codegen_flags: <defaults>
</compile_context>

<pallas_src>
import functools
import math

import jax
import jax.numpy as jnp
from jax.experimental import pallas as pl
from jax.experimental.pallas import tpu as pltpu

LANE = 128
SUBLANE = 8


def _round_up(v, m):
    return ((v + m - 1) // m) * m


# ---------------------------------------------------------------------------
# Kernel: one batch tile through a chain of FC layers, fully in VMEM/vregs.
# ---------------------------------------------------------------------------
def _fused_mlp_kernel(*refs, num_layers, relu_flags):
    """refs = (x_ref, w_0..w_{L-1}, b_0..b_{L-1}, o_ref)

    x_ref : (TM, K0_pad)        bf16 activation tile (pipelined)
    w_l   : (Kl_pad, Nl_pad)    bf16, whole-array resident in VMEM
    b_l   : (1, Nl_pad)         f32,  whole-array resident in VMEM
    o_ref : (TM, N_last_pad)    bf16 (intermediate segment) or f32 (final)
    """
    x_ref = refs[0]
    w_refs = refs[1:1 + num_layers]
    b_refs = refs[1 + num_layers:1 + 2 * num_layers]
    o_ref = refs[1 + 2 * num_layers]

    h = x_ref[...]
    for l in range(num_layers):  # static unroll over layers
        y = jnp.dot(h.astype(jnp.bfloat16), w_refs[l][...],
                    preferred_element_type=jnp.float32)
        y = y + b_refs[l][...]                 # f32 epilogue (v5e-safe)
        if relu_flags[l]:
            y = jnp.maximum(y, 0.0)
        h = y
    o_ref[...] = h.astype(o_ref.dtype)


# ---------------------------------------------------------------------------
# VMEM accounting helpers.
# ---------------------------------------------------------------------------
def _vmem_budget_bytes():
    """Usable per-core VMEM (capacity minus headroom), generation-aware."""
    try:
        cap = pltpu.get_tpu_info().vmem_capacity_bytes
    except Exception:  # pragma: no cover - fallback when the query is absent
        cap = 64 << 20
    return int(cap - max(cap // 8, 8 << 20))


def _layer_resident_bytes(k_pad, n_pad):
    # bf16 weight + f32 bias (bias padded to a full (8, n_pad) sublane tile).
    return k_pad * n_pad * 2 + SUBLANE * n_pad * 4


def _tile_bytes(tm, in_pad, out_pad, max_pad, out_itemsize):
    x_tiles = 2 * tm * in_pad * 2              # bf16 x tile, double-buffered
    o_tiles = 2 * tm * out_pad * out_itemsize  # out tile, double-buffered
    scratch = 2 * tm * max_pad * 4             # f32 intermediates (h / y)
    return x_tiles + o_tiles + scratch


# ---------------------------------------------------------------------------
# One fused segment = one pallas_call over a chain of layers.
# ---------------------------------------------------------------------------
def _run_segment(x_pad, ws, bs, relu_flags, out_dtype, budget):
    m, in_pad = x_pad.shape
    num_layers = len(ws)
    out_pad = ws[-1].shape[1]
    max_pad = max([in_pad] + [w.shape[1] for w in ws])
    resident = sum(_layer_resident_bytes(*w.shape) for w in ws)
    out_itemsize = jnp.dtype(out_dtype).itemsize

    # Budget-driven batch tile: biggest TM (multiple of 8) whose tiles fit.
    tm = SUBLANE
    for cand in (1024, 768, 512, 384, 256, 128, 64, 32, 16, 8):
        if resident + _tile_bytes(cand, in_pad, out_pad, max_pad,
                                  out_itemsize) <= budget:
            tm = cand
            break
    tm = min(tm, _round_up(m, SUBLANE))
    # Keep >= 2 grid steps when the batch allows so the "parallel" batch axis
    # can shard across both TensorCores on v7x (no-op on v5e/v6e).
    if _round_up(m, tm) == tm and m >= 2 * SUBLANE:
        tm = _round_up((m + 1) // 2, SUBLANE)
    m_pad = _round_up(m, tm)

    if m_pad != m:
        x_pad = jnp.zeros((m_pad, in_pad), x_pad.dtype).at[:m].set(x_pad)

    kernel = functools.partial(_fused_mlp_kernel,
                               num_layers=num_layers,
                               relu_flags=tuple(relu_flags))

    in_specs = ([pl.BlockSpec((tm, in_pad), lambda i: (i, 0))]
                + [pl.BlockSpec(memory_space=pltpu.MemorySpace.VMEM)]
                * (2 * num_layers))

    out = pl.pallas_call(
        kernel,
        out_shape=jax.ShapeDtypeStruct((m_pad, out_pad), out_dtype),
        grid=(m_pad // tm,),
        in_specs=in_specs,
        out_specs=pl.BlockSpec((tm, out_pad), lambda i: (i, 0)),
        compiler_params=pltpu.CompilerParams(
            dimension_semantics=("parallel",),
            vmem_limit_bytes=int(budget),
        ),
    )(x_pad, *ws, *bs)

    return out[:m] if m_pad != m else out


# ---------------------------------------------------------------------------
# Builder: pad/stack params per layer, segment by VMEM budget, jit forward.
# ---------------------------------------------------------------------------
def make_fused_ml_nn(params):
    """params: list of (w (indim,outdim) f32, b (outdim,) f32, act) tuples."""
    num_layers = len(params)
    out_dim = params[-1][0].shape[1]
    relu_flags = tuple(act == 'relu' for (_, _, act) in params)

    # Per-layer lane-dense padding; weights in bf16 (MXU operands), biases f32.
    ws, bs = [], []
    for (w, b, _) in params:
        k, n = w.shape
        k_pad, n_pad = _round_up(k, LANE), _round_up(n, LANE)
        w_pad = jnp.zeros((k_pad, n_pad), jnp.bfloat16).at[:k, :n].set(
            w.astype(jnp.bfloat16))
        b_pad = jnp.zeros((1, n_pad), jnp.float32).at[0, :n].set(
            b.astype(jnp.float32))
        ws.append(w_pad)
        bs.append(b_pad)

    budget = _vmem_budget_bytes()

    # Greedy segmentation: each segment's weights+biases must stay fully
    # resident in VMEM alongside minimally-sized activation tiles.
    segments = []
    start = 0
    while start < num_layers:
        end = start
        resident = 0
        while end < num_layers:
            cand_res = resident + _layer_resident_bytes(*ws[end].shape)
            in_pad = ws[start].shape[0]
            o_pad = ws[end].shape[1]
            mx_pad = max([in_pad] + [w.shape[1] for w in ws[start:end + 1]])
            if cand_res + _tile_bytes(SUBLANE, in_pad, o_pad, mx_pad,
                                      4) > budget:
                break
            resident = cand_res
            end += 1
        if end == start:
            # TODO(synk): single layer wider than the VMEM budget needs a
            # K/N-blocked weight-streaming grid axis; not implemented here.
            raise NotImplementedError(
                "single FC layer exceeds the VMEM budget; needs streaming")
        segments.append((start, end))
        start = end

    def _forward(x, ws, bs):
        m, k = x.shape
        in_pad0 = ws[0].shape[0]
        h = jnp.zeros((m, in_pad0), jnp.bfloat16).at[:, :k].set(
            x.astype(jnp.bfloat16))
        for si, (s, e) in enumerate(segments):
            last = si == len(segments) - 1
            out_dtype = jnp.float32 if last else jnp.bfloat16
            h = _run_segment(h, ws[s:e], bs[s:e], relu_flags[s:e],
                             out_dtype, budget)
        return h[:, :out_dim]

    jitted = jax.jit(_forward)
    return lambda x: jitted(x, tuple(ws), tuple(bs))


# ---------------------------------------------------------------------------
# Parameter init mirroring FC.__init__ (kaiming_uniform(a=sqrt(5)) on w,
# uniform(-0.1, 0.1) on b).  PyTorch fan_in for a (indim,outdim) tensor is
# outdim, giving bound 1/sqrt(outdim).
# ---------------------------------------------------------------------------
def init_ml_nn_params(key, neur, number_layers, input_dim, out_dim):
    dims = []
    if number_layers == 0:
        dims.append((input_dim, out_dim, None))
    else:
        dims.append((input_dim, neur, 'relu'))
        for _ in range(number_layers - 1):
            dims.append((neur, neur, 'relu'))
        dims.append((neur, out_dim, None))

    params = []
    for (indim, outdim, act) in dims:
        key, kw, kb = jax.random.split(key, 3)
        bound = 1.0 / math.sqrt(outdim)
        w = jax.random.uniform(kw, (indim, outdim), jnp.float32, -bound, bound)
        b = jax.random.uniform(kb, (outdim,), jnp.float32, -0.1, 0.1)
        params.append((w, b, act))
    return params


def ml_nn_forward_ref(x, params):
    """Pure-JAX f32 reference for correctness check."""
    for (w, b, act) in params:
        x = x @ w + b
        if act == 'relu':
            x = jnp.maximum(x, 0.0)
    return x


if __name__ == "__main__":
    # Module-consistent small shapes: batch=8, input_dim=16, neur=32,
    # number_layers=2 (=> 3 FC layers total), out_dim=8.
    key = jax.random.PRNGKey(0)
    key, kx = jax.random.split(key)

    batch, input_dim, neur, number_layers, out_dim = 8, 16, 32, 2, 8
    x = jax.random.normal(kx, (batch, input_dim), jnp.float32)

    params = init_ml_nn_params(key, neur, number_layers, input_dim, out_dim)

    forward = make_fused_ml_nn(params)
    out = jax.block_until_ready(forward(x))

    ref = ml_nn_forward_ref(x, params)
    assert out.shape == (batch, out_dim), out.shape
    # bf16 MXU operands => loosened tolerance vs the f32 reference.
    assert jnp.allclose(out, ref, atol=5e-2, rtol=5e-2), (
        float(jnp.max(jnp.abs(out - ref))))

    print("KERNEL_OK")
</pallas_src>

<mosaic_0001>
module attributes {stable_mosaic.version = 11 : i64} {
  func.func @_fused_mlp_kernel(%arg0: i32, %arg1: memref<8x128xbf16, #tpu.memory_space<vmem>>, %arg2: memref<128x128xbf16, #tpu.memory_space<vmem>>, %arg3: memref<128x128xbf16, #tpu.memory_space<vmem>>, %arg4: memref<128x128xbf16, #tpu.memory_space<vmem>>, %arg5: memref<1x128xf32, #tpu.memory_space<vmem>>, %arg6: memref<1x128xf32, #tpu.memory_space<vmem>>, %arg7: memref<1x128xf32, #tpu.memory_space<vmem>>, %arg8: memref<8x128xf32, #tpu.memory_space<vmem>>) attributes {dimension_semantics = [#tpu.dimension_semantics<parallel>], iteration_bounds = array<i64: 1>, scalar_prefetch = 0 : i64, scratch_operands = 0 : i64, tpu.core_type = #tpu.core_type<tc>, window_params = [{transform_indices = @transform_0, window_bounds = array<i64: 8, 128>}, {pipeline_mode = #tpu.pipeline_mode<synchronous>, transform_indices = @transform_1, window_bounds = array<i64: 128, 128>}, {pipeline_mode = #tpu.pipeline_mode<synchronous>, transform_indices = @transform_2, window_bounds = array<i64: 128, 128>}, {pipeline_mode = #tpu.pipeline_mode<synchronous>, transform_indices = @transform_3, window_bounds = array<i64: 128, 128>}, {pipeline_mode = #tpu.pipeline_mode<synchronous>, transform_indices = @transform_4, window_bounds = array<i64: 1, 128>}, {pipeline_mode = #tpu.pipeline_mode<synchronous>, transform_indices = @transform_5, window_bounds = array<i64: 1, 128>}, {pipeline_mode = #tpu.pipeline_mode<synchronous>, transform_indices = @transform_6, window_bounds = array<i64: 1, 128>}, {transform_indices = @transform_7, window_bounds = array<i64: 8, 128>}]} {
    %c0 = arith.constant 0 : index
    %c0_0 = arith.constant 0 : index
    %0 = vector.load %arg1[%c0, %c0_0] : memref<8x128xbf16, #tpu.memory_space<vmem>>, vector<8x128xbf16>
    %c0_1 = arith.constant 0 : index
    %c0_2 = arith.constant 0 : index
    %1 = vector.load %arg2[%c0_1, %c0_2] : memref<128x128xbf16, #tpu.memory_space<vmem>>, vector<128x128xbf16>
    %cst = arith.constant dense<0.000000e+00> : vector<8x128xf32>
    %2 = tpu.matmul %0, %1, %cst {dimension_numbers = #tpu.dot_dimension_numbers<[1], [0], [0], [1], [0, 0, 1, 1], [], []>} : vector<8x128xbf16>, vector<128x128xbf16>, vector<8x128xf32> -> vector<8x128xf32>
    %c0_3 = arith.constant 0 : index
    %c0_4 = arith.constant 0 : index
    %3 = vector.load %arg5[%c0_3, %c0_4] : memref<1x128xf32, #tpu.memory_space<vmem>>, vector<1x128xf32>
    %4 = vector.broadcast %3 : vector<1x128xf32> to vector<8x128xf32>
    %5 = arith.addf %2, %4 : vector<8x128xf32>
    %cst_5 = arith.constant 0.000000e+00 : f32
    %6 = vector.broadcast %cst_5 : f32 to vector<8x128xf32>
    %7 = arith.maximumf %5, %6 : vector<8x128xf32>
    %8 = arith.truncf %7 : vector<8x128xf32> to vector<8x128xbf16>
    %c0_6 = arith.constant 0 : index
    %c0_7 = arith.constant 0 : index
    %9 = vector.load %arg3[%c0_6, %c0_7] : memref<128x128xbf16, #tpu.memory_space<vmem>>, vector<128x128xbf16>
    %cst_8 = arith.constant dense<0.000000e+00> : vector<8x128xf32>
    %10 = tpu.matmul %8, %9, %cst_8 {dimension_numbers = #tpu.dot_dimension_numbers<[1], [0], [0], [1], [0, 0, 1, 1], [], []>} : vector<8x128xbf16>, vector<128x128xbf16>, vector<8x128xf32> -> vector<8x128xf32>
    %c0_9 = arith.constant 0 : index
    %c0_10 = arith.constant 0 : index
    %11 = vector.load %arg6[%c0_9, %c0_10] : memref<1x128xf32, #tpu.memory_space<vmem>>, vector<1x128xf32>
    %12 = vector.broadcast %11 : vector<1x128xf32> to vector<8x128xf32>
    %13 = arith.addf %10, %12 : vector<8x128xf32>
    %cst_11 = arith.constant 0.000000e+00 : f32
    %14 = vector.broadcast %cst_11 : f32 to vector<8x128xf32>
    %15 = arith.maximumf %13, %14 : vector<8x128xf32>
    %16 = arith.truncf %15 : vector<8x128xf32> to vector<8x128xbf16>
    %c0_12 = arith.constant 0 : index
    %c0_13 = arith.constant 0 : index
    %17 = vector.load %arg4[%c0_12, %c0_13] : memref<128x128xbf16, #tpu.memory_space<vmem>>, vector<128x128xbf16>
    %cst_14 = arith.constant dense<0.000000e+00> : vector<8x128xf32>
    %18 = tpu.matmul %16, %17, %cst_14 {dimension_numbers = #tpu.dot_dimension_numbers<[1], [0], [0], [1], [0, 0, 1, 1], [], []>} : vector<8x128xbf16>, vector<128x128xbf16>, vector<8x128xf32> -> vector<8x128xf32>
    %c0_15 = arith.constant 0 : index
    %c0_16 = arith.constant 0 : index
    %19 = vector.load %arg7[%c0_15, %c0_16] : memref<1x128xf32, #tpu.memory_space<vmem>>, vector<1x128xf32>
    %20 = vector.broadcast %19 : vector<1x128xf32> to vector<8x128xf32>
    %21 = arith.addf %18, %20 : vector<8x128xf32>
    %c0_17 = arith.constant 0 : index
    %c0_18 = arith.constant 0 : index
    %22 = vector.load %arg8[%c0_17, %c0_18] : memref<8x128xf32, #tpu.memory_space<vmem>>, vector<8x128xf32>
    tpu.vector_store %arg8[%c0_17, %c0_18], %21 {strides = array<i32>} : memref<8x128xf32, #tpu.memory_space<vmem>>, vector<8x128xf32>,
    return
  }
  func.func @transform_0(%arg0: i32) -> (i32, i32) {
    %c0_i32 = arith.constant 0 : i32
    %c0_i32_0 = arith.constant 0 : i32
    return %arg0, %c0_i32 : i32, i32
  }
  func.func @transform_1(%arg0: i32) -> (i32, i32) {
    %c0_i32 = arith.constant 0 : i32
    %c0_i32_0 = arith.constant 0 : i32
    %c0_i32_1 = arith.constant 0 : i32
    return %c0_i32, %c0_i32_0 : i32, i32
  }
  func.func @transform_2(%arg0: i32) -> (i32, i32) {
    %c0_i32 = arith.constant 0 : i32
    %c0_i32_0 = arith.constant 0 : i32
    %c0_i32_1 = arith.constant 0 : i32
    return %c0_i32, %c0_i32_0 : i32, i32
  }
  func.func @transform_3(%arg0: i32) -> (i32, i32) {
    %c0_i32 = arith.constant 0 : i32
    %c0_i32_0 = arith.constant 0 : i32
    %c0_i32_1 = arith.constant 0 : i32
    return %c0_i32, %c0_i32_0 : i32, i32
  }
  func.func @transform_4(%arg0: i32) -> (i32, i32) {
    %c0_i32 = arith.constant 0 : i32
    %c0_i32_0 = arith.constant 0 : i32
    %c0_i32_1 = arith.constant 0 : i32
    return %c0_i32, %c0_i32_0 : i32, i32
  }
  func.func @transform_5(%arg0: i32) -> (i32, i32) {
    %c0_i32 = arith.constant 0 : i32
    %c0_i32_0 = arith.constant 0 : i32
    %c0_i32_1 = arith.constant 0 : i32
    return %c0_i32, %c0_i32_0 : i32, i32
  }
  func.func @transform_6(%arg0: i32) -> (i32, i32) {
    %c0_i32 = arith.constant 0 : i32
    %c0_i32_0 = arith.constant 0 : i32
    %c0_i32_1 = arith.constant 0 : i32
    return %c0_i32, %c0_i32_0 : i32, i32
  }
  func.func @transform_7(%arg0: i32) -> (i32, i32) {
    %c0_i32 = arith.constant 0 : i32
    %c0_i32_0 = arith.constant 0 : i32
    return %arg0, %c0_i32 : i32, i32
  }
}

</mosaic_0001>

<llo_original>
// kernel: _forward.1
$region0: #{_forward.1}
  #allocation0 [shape = 'u32[]', space=smem, size = 0x4, offset = 0x4, fixed_abs, tag = 'smem constant byte address 0x4 - core index']
  #allocation1 [shape = 'u32[144,128]{1,0:T(1,128)}', space=vmem, size = 0x12000, scoped, tag = 'internal scratch']
  %s0 = inlined_call_operand.vmem [shape: bf16[8,128], index: 0, kind: input, shape index: {}]
  %s1 = inlined_call_operand.hbm [shape: bf16[128,128], index: 1, kind: input, shape index: {}]
  %s2 = inlined_call_operand.hbm [shape: bf16[128,128], index: 2, kind: input, shape index: {}]
  %s3 = inlined_call_operand.hbm [shape: bf16[128,128], index: 3, kind: input, shape index: {}]
  %s4 = inlined_call_operand.vmem [shape: f32[1,128], index: 4, kind: input, shape index: {}]
  %s5 = inlined_call_operand.vmem [shape: f32[1,128], index: 5, kind: input, shape index: {}]
  %s6 = inlined_call_operand.vmem [shape: f32[1,128], index: 6, kind: input, shape index: {}]
  %s7 = inlined_call_operand.hbm [shape: f32[8,128], index: 7, kind: output, shape index: {}]
  %s8 = sld [smem:[#allocation0]]
  $region50: #{_forward.1} parent=0
    _
  %s10 = ssub.s32 1, %s8
  %s11 = scalar_select 0, %s10, %s8
  $region1: #{_forward.1} parent=0
    #allocation2 [shape = 'u8[32768]{0}', space=vmem, size = 0x8000, scoped, tag = 'input window, operand 1, single buffered']
    #allocation3 [shape = 's32[1]{0}', space=sflag, size = 0x4, scoped, tag = 'scoped memory for _forward.1']
    #allocation4 [shape = 's32[1]{0}', space=sflag, size = 0x4, scoped, tag = 'scoped memory for _forward.1']
    #allocation5 [shape = 'u8[32768]{0}', space=vmem, size = 0x8000, scoped, tag = 'input window, operand 2, single buffered']
    #allocation6 [shape = 's32[1]{0}', space=sflag, size = 0x4, scoped, tag = 'scoped memory for _forward.1']
    #allocation7 [shape = 'u8[32768]{0}', space=vmem, size = 0x8000, scoped, tag = 'input window, operand 3, single buffered']
    #allocation8 [shape = 'u8[4096]{0}', space=vmem, size = 0x1000, scoped, tag = 'output window, operand 0, single buffered']
    %12 = vsyncpa [#allocation3], 0
    %13 = vsyncpa [#allocation6], 0
    %14 = vsyncpa [#allocation4], 0
    // Predicated region
    $region2: #{_forward.1} parent=1 // pred_check
      _
    $region3: #{_forward.1} parent=1 // pred_check_branch
      %16 = sbr.rel (0) target = $region5
    $region4: #{_forward.1} parent=1 // pred_region
      _
    $region5: #{_forward.1} parent=1 // pred_fallthru
      _
    // Predicated region
    $region6: #{_forward.1} parent=1 // pred_check
      _
    $region7: #{_forward.1} parent=1 // pred_check_branch
      %18 = sbr.rel (0) target = $region9
    $region8: #{_forward.1} parent=1 // pred_region
      %s20 = ssub.s32 1024, 1024
      %21 = vsyncadd [#allocation3], %s20
      %s22 = sshll.u32 [#allocation2], 4
      %s23 = int_to_ptr.vmem [resolvable:$true] %s22
      %28 = dma.hbm_to_vmem [thread:$0]  %s1, 1024, %s23, [#allocation3], 64, 64, 4
    $region9: #{_forward.1} parent=1 // pred_fallthru
      _
    // Predicated region
    $region10: #{_forward.1} parent=1 // pred_check
      _
    $region11: #{_forward.1} parent=1 // pred_check_branch
      %30 = sbr.rel (0) target = $region13
    $region12: #{_forward.1} parent=1 // pred_region
      %s32 = ssub.s32 1024, 1024
      %33 = vsyncadd [#allocation6], %s32
      %s34 = sshll.u32 [#allocation5], 4
      %s35 = int_to_ptr.vmem [resolvable:$true] %s34
      %40 = dma.hbm_to_vmem [thread:$0]  %s2, 1024, %s35, [#allocation6], 64, 64, 4
    $region13: #{_forward.1} parent=1 // pred_fallthru
      _
    // Predicated region
    $region14: #{_forward.1} parent=1 // pred_check
      _
    $region15: #{_forward.1} parent=1 // pred_check_branch
      %42 = sbr.rel (0) target = $region17
    $region16: #{_forward.1} parent=1 // pred_region
      %s44 = ssub.s32 1024, 1024
      %45 = vsyncadd [#allocation6], %s44
      %s46 = sshll.u32 [#allocation7], 4
      %s47 = int_to_ptr.vmem [resolvable:$true] %s46
      %52 = dma.hbm_to_vmem [thread:$0]  %s3, 1024, %s47, [#allocation6], 64, 64, 4
    $region17: #{_forward.1} parent=1 // pred_fallthru
      _
    // Predicated region
    $region18: #{_forward.1} parent=1 // pred_check
      _
    $region19: #{_forward.1} parent=1 // pred_check_branch
      %54 = sbr.rel (0) target = $region21
    $region20: #{_forward.1} parent=1 // pred_region
      _
    $region21: #{_forward.1} parent=1 // pred_fallthru
      _
    // Predicated region
    $region22: #{_forward.1} parent=1 // pred_check
      _
    $region23: #{_forward.1} parent=1 // pred_check_branch
      %56 = sbr.rel (0) target = $region25
    $region24: #{_forward.1} parent=1 // pred_region
      _
    $region25: #{_forward.1} parent=1 // pred_fallthru
      _
    // Predicated region
    $region26: #{_forward.1} parent=1 // pred_check
      _
    $region27: #{_forward.1} parent=1 // pred_check_branch
      %58 = sbr.rel (0) target = $region29
    $region28: #{_forward.1} parent=1 // pred_region
      _
    $region29: #{_forward.1} parent=1 // pred_fallthru
      _
    // Predicated region
    $region30: #{_forward.1} parent=1 // pred_check
      _
    $region31: #{_forward.1} parent=1 // pred_check_branch
      %60 = sbr.rel (0) target = $region33
    $region32: #{_forward.1} parent=1 // pred_region
      %61 = dma.done [#allocation3], 1024
    $region33: #{_forward.1} parent=1 // pred_fallthru
      _
    // Predicated region
    $region34: #{_forward.1} parent=1 // pred_check
      _
    $region35: #{_forward.1} parent=1 // pred_check_branch
      %63 = sbr.rel (0) target = $region37
    $region36: #{_forward.1} parent=1 // pred_region
      %64 = dma.done [#allocation6], 1024
    $region37: #{_forward.1} parent=1 // pred_fallthru
      _
    // Predicated region
    $region38: #{_forward.1} parent=1 // pred_check
      _
    $region39: #{_forward.1} parent=1 // pred_check_branch
      %66 = sbr.rel (0) target = $region41
    $region40: #{_forward.1} parent=1 // pred_region
      %67 = dma.done [#allocation6], 1024
    $region41: #{_forward.1} parent=1 // pred_fallthru
      _
    %v69 = vld [vmem:[%s0] sm:$0xf]
    %v70 = vld [vmem:[#allocation2] sm:$0xf]
    %v71 = vld [vmem:[#allocation2 + $0x4] sm:$0xf]
    %v72 = vld [vmem:[#allocation2 + $0x8] sm:$0xf]
    %v73 = vld [vmem:[#allocation2 + $0xc] sm:$0xf]
    %v74 = vld [vmem:[#allocation2 + $0x10] sm:$0xf]
    %v75 = vld [vmem:[#allocation2 + $0x14] sm:$0xf]
    %v76 = vld [vmem:[#allocation2 + $0x18] sm:$0xf]
    %v77 = vld [vmem:[#allocation2 + $0x1c] sm:$0xf]
    %v78 = vld [vmem:[#allocation2 + $0x20] sm:$0xf]
    %v79 = vld [vmem:[#allocation2 + $0x24] sm:$0xf]
    %v80 = vld [vmem:[#allocation2 + $0x28] sm:$0xf]
    %v81 = vld [vmem:[#allocation2 + $0x2c] sm:$0xf]
    %v82 = vld [vmem:[#allocation2 + $0x30] sm:$0xf]
    %v83 = vld [vmem:[#allocation2 + $0x34] sm:$0xf]
    %v84 = vld [vmem:[#allocation2 + $0x38] sm:$0xf]
    %v85 = vld [vmem:[#allocation2 + $0x3c] sm:$0xf]
    %v86 = vld [vmem:[%s4] sm:$0x1]
    %v88 = vlaneseq
    %v89 = vshrl.u32 %v88, 7
    %v90 = vsub.s32 0, %v89
    %v91 = vrot.slane %v86, %v90
    %v109 = vunpack.c.l.b16 %v70
    %v110 = vunpack.c.l.b16 %v71
    %v111 = vunpack.c.l.b16 %v72
    %v112 = vunpack.c.l.b16 %v73
    %v113 = vunpack.c.l.b16 %v74
    %v114 = vunpack.c.l.b16 %v75
    %v115 = vunpack.c.l.b16 %v76
    %v116 = vunpack.c.l.b16 %v77
    %v117 = vunpack.c.l.b16 %v78
    %v118 = vunpack.c.l.b16 %v79
    %v119 = vunpack.c.l.b16 %v80
    %v120 = vunpack.c.l.b16 %v81
    %v121 = vunpack.c.l.b16 %v82
    %v122 = vunpack.c.l.b16 %v83
    %v123 = vunpack.c.l.b16 %v84
    %v124 = vunpack.c.l.b16 %v85
    %v125 = vpack.c.b16 %v110, %v109
    %v126 = vpack.c.b16 %v112, %v111
    %v127 = vpack.c.b16 %v114, %v113
    %v128 = vpack.c.b16 %v116, %v115
    %v129 = vpack.c.b16 %v118, %v117
    %v130 = vpack.c.b16 %v120, %v119
    %v131 = vpack.c.b16 %v122, %v121
    %v132 = vpack.c.b16 %v124, %v123
    %141 = vmatprep.subr.bf16.mxu0 0
    %142 = vmatpush1.bf16.msra.mxu0 %v125
    %143 = vmatprep.subr.bf16.mxu0 0
    %144 = vmatpush1.bf16.msra.mxu0 %v126
    %145 = vmatprep.subr.bf16.mxu0 0
    %146 = vmatpush1.bf16.msra.mxu0 %v127
    %147 = vmatprep.subr.bf16.mxu0 0
    %148 = vmatpush1.bf16.msra.mxu0 %v128
    %149 = vmatprep.subr.bf16.mxu0 0
    %150 = vmatpush1.bf16.msra.mxu0 %v129
    %151 = vmatprep.subr.bf16.mxu0 0
    %152 = vmatpush1.bf16.msra.mxu0 %v130
    %153 = vmatprep.subr.bf16.mxu0 0
    %154 = vmatpush1.bf16.msra.mxu0 %v131
    %155 = vmatprep.subr.bf16.mxu0 0
    %156 = vmatpush1.bf16.msra.mxu0 %v132
    %157 = vmatprep.subr.bf16.mxu0 0
    %158 = vmatpush1.bf16.msra.mxu0 0
    %159 = vmatprep.subr.bf16.mxu0 0
    %160 = vmatpush1.bf16.msra.mxu0 0
    %161 = vmatprep.subr.bf16.mxu0 0
    %162 = vmatpush1.bf16.msra.mxu0 0
    %163 = vmatprep.subr.bf16.mxu0 0
    %164 = vmatpush1.bf16.msra.mxu0 0
    %165 = vmatprep.subr.bf16.mxu0 0
    %166 = vmatpush1.bf16.msra.mxu0 0
    %167 = vmatprep.subr.bf16.mxu0 0
    %168 = vmatpush1.bf16.msra.mxu0 0
    %169 = vmatprep.subr.bf16.mxu0 0
    %170 = vmatpush1.bf16.msra.mxu0 0
    %171 = vmatprep.subr.bf16.mxu0 0
    %172 = vmatpush1.bf16.msra.mxu0 0
    %173 = vmatprep.mubr.bf16.mxu0 0
    %174 = vmatmul.mubr.bf16.gmra.mrb[0].mxu0 %v69
    %v175 = vpop.f32.mrb[0].mxu0
    %v176 = vadd.f32 %v91, %v175
    %v177 = vpop.f32.mrb[0].mxu0
    %v178 = vpop.f32.mrb[0].mxu0
    %v179 = vpop.f32.mrb[0].mxu0
    %180 = vdwg.mxu0
    %v181 = vmax.f32 %v176, 0.0
    %v182 = vpack.c.bf16 %v181, %v181
    %v183 = vld [vmem:[#allocation5] sm:$0xf]
    %v184 = vld [vmem:[#allocation5 + $0x4] sm:$0xf]
    %v185 = vld [vmem:[#allocation5 + $0x8] sm:$0xf]
    %v186 = vld [vmem:[#allocation5 + $0xc] sm:$0xf]
    %v187 = vld [vmem:[#allocation5 + $0x10] sm:$0xf]
    %v188 = vld [vmem:[#allocation5 + $0x14] sm:$0xf]
    %v189 = vld [vmem:[#allocation5 + $0x18] sm:$0xf]
    %v190 = vld [vmem:[#allocation5 + $0x1c] sm:$0xf]
    %v191 = vld [vmem:[#allocation5 + $0x20] sm:$0xf]
    %v192 = vld [vmem:[#allocation5 + $0x24] sm:$0xf]
    %v193 = vld [vmem:[#allocation5 + $0x28] sm:$0xf]
    %v194 = vld [vmem:[#allocation5 + $0x2c] sm:$0xf]
    %v195 = vld [vmem:[#allocation5 + $0x30] sm:$0xf]
    %v196 = vld [vmem:[#allocation5 + $0x34] sm:$0xf]
    %v197 = vld [vmem:[#allocation5 + $0x38] sm:$0xf]
    %v198 = vld [vmem:[#allocation5 + $0x3c] sm:$0xf]
    %v199 = vld [vmem:[%s5] sm:$0x1]
    %v201 = vlaneseq
    %v202 = vshrl.u32 %v201, 7
    %v203 = vsub.s32 0, %v202
    %v204 = vrot.slane %v199, %v203
    %v222 = vunpack.c.l.b16 %v183
    %v223 = vunpack.c.l.b16 %v184
    %v224 = vunpack.c.l.b16 %v185
    %v225 = vunpack.c.l.b16 %v186
    %v226 = vunpack.c.l.b16 %v187
    %v227 = vunpack.c.l.b16 %v188
    %v228 = vunpack.c.l.b16 %v189
    %v229 = vunpack.c.l.b16 %v190
    %v230 = vunpack.c.l.b16 %v191
    %v231 = vunpack.c.l.b16 %v192
    %v232 = vunpack.c.l.b16 %v193
    %v233 = vunpack.c.l.b16 %v194
    %v234 = vunpack.c.l.b16 %v195
    %v235 = vunpack.c.l.b16 %v196
    %v236 = vunpack.c.l.b16 %v197
    %v237 = vunpack.c.l.b16 %v198
    %v238 = vpack.c.b16 %v223, %v222
    %v239 = vpack.c.b16 %v225, %v224
    %v240 = vpack.c.b16 %v227, %v226
    %v241 = vpack.c.b16 %v229, %v228
    %v242 = vpack.c.b16 %v231, %v230
    %v243 = vpack.c.b16 %v233, %v232
    %v244 = vpack.c.b16 %v235, %v234
    %v245 = vpack.c.b16 %v237, %v236
    %254 = vmatprep.subr.bf16.mxu0 0
    %255 = vmatpush1.bf16.msra.mxu0 %v238
    %256 = vmatprep.subr.bf16.mxu0 0
    %257 = vmatpush1.bf16.msra.mxu0 %v239
    %258 = vmatprep.subr.bf16.mxu0 0
    %259 = vmatpush1.bf16.msra.mxu0 %v240
    %260 = vmatprep.subr.bf16.mxu0 0
    %261 = vmatpush1.bf16.msra.mxu0 %v241
    %262 = vmatprep.subr.bf16.mxu0 0
    %263 = vmatpush1.bf16.msra.mxu0 %v242
    %264 = vmatprep.subr.bf16.mxu0 0
    %265 = vmatpush1.bf16.msra.mxu0 %v243
    %266 = vmatprep.subr.bf16.mxu0 0
    %267 = vmatpush1.bf16.msra.mxu0 %v244
    %268 = vmatprep.subr.bf16.mxu0 0
    %269 = vmatpush1.bf16.msra.mxu0 %v245
    %270 = vmatprep.subr.bf16.mxu0 0
    %271 = vmatpush1.bf16.msra.mxu0 0
    %272 = vmatprep.subr.bf16.mxu0 0
    %273 = vmatpush1.bf16.msra.mxu0 0
    %274 = vmatprep.subr.bf16.mxu0 0
    %275 = vmatpush1.bf16.msra.mxu0 0
    %276 = vmatprep.subr.bf16.mxu0 0
    %277 = vmatpush1.bf16.msra.mxu0 0
    %278 = vmatprep.subr.bf16.mxu0 0
    %279 = vmatpush1.bf16.msra.mxu0 0
    %280 = vmatprep.subr.bf16.mxu0 0
    %281 = vmatpush1.bf16.msra.mxu0 0
    %282 = vmatprep.subr.bf16.mxu0 0
    %283 = vmatpush1.bf16.msra.mxu0 0
    %284 = vmatprep.subr.bf16.mxu0 0
    %285 = vmatpush1.bf16.msra.mxu0 0
    %286 = vmatprep.mubr.bf16.mxu0 0
    %287 = vmatmul.mubr.bf16.gmra.mrb[0].mxu0 %v182
    %v288 = vpop.f32.mrb[0].mxu0
    %v289 = vadd.f32 %v204, %v288
    %v290 = vpop.f32.mrb[0].mxu0
    %v291 = vpop.f32.mrb[0].mxu0
    %v292 = vpop.f32.mrb[0].mxu0
    %293 = vdwg.mxu0
    %v294 = vmax.f32 %v289, 0.0
    %v295 = vpack.c.bf16 %v294, %v294
    %v296 = vld [vmem:[#allocation7] sm:$0xf]
    %v297 = vld [vmem:[#allocation7 + $0x4] sm:$0xf]
    %v298 = vld [vmem:[#allocation7 + $0x8] sm:$0xf]
    %v299 = vld [vmem:[#allocation7 + $0xc] sm:$0xf]
    %v300 = vld [vmem:[#allocation7 + $0x10] sm:$0xf]
    %v301 = vld [vmem:[#allocation7 + $0x14] sm:$0xf]
    %v302 = vld [vmem:[#allocation7 + $0x18] sm:$0xf]
    %v303 = vld [vmem:[#allocation7 + $0x1c] sm:$0xf]
    %v304 = vld [vmem:[#allocation7 + $0x20] sm:$0xf]
    %v305 = vld [vmem:[#allocation7 + $0x24] sm:$0xf]
    %v306 = vld [vmem:[#allocation7 + $0x28] sm:$0xf]
    %v307 = vld [vmem:[#allocation7 + $0x2c] sm:$0xf]
    %v308 = vld [vmem:[#allocation7 + $0x30] sm:$0xf]
    %v309 = vld [vmem:[#allocation7 + $0x34] sm:$0xf]
    %v310 = vld [vmem:[#allocation7 + $0x38] sm:$0xf]
    %v311 = vld [vmem:[#allocation7 + $0x3c] sm:$0xf]
    %v312 = vld [vmem:[%s6] sm:$0x1]
    %v314 = vlaneseq
    %v315 = vshrl.u32 %v314, 7
    %v316 = vsub.s32 0, %v315
    %v317 = vrot.slane %v312, %v316
    %v335 = vunpack.c.l.b16 %v296
    %v336 = vunpack.c.l.b16 %v297
    %v337 = vunpack.c.l.b16 %v298
    %v338 = vunpack.c.l.b16 %v299
    %v339 = vunpack.c.l.b16 %v300
    %v340 = vunpack.c.l.b16 %v301
    %v341 = vunpack.c.l.b16 %v302
    %v342 = vunpack.c.l.b16 %v303
    %v343 = vunpack.c.l.b16 %v304
    %v344 = vunpack.c.l.b16 %v305
    %v345 = vunpack.c.l.b16 %v306
    %v346 = vunpack.c.l.b16 %v307
    %v347 = vunpack.c.l.b16 %v308
    %v348 = vunpack.c.l.b16 %v309
    %v349 = vunpack.c.l.b16 %v310
    %v350 = vunpack.c.l.b16 %v311
    %v351 = vpack.c.b16 %v336, %v335
    %v352 = vpack.c.b16 %v338, %v337
    %v353 = vpack.c.b16 %v340, %v339
    %v354 = vpack.c.b16 %v342, %v341
    %v355 = vpack.c.b16 %v344, %v343
    %v356 = vpack.c.b16 %v346, %v345
    %v357 = vpack.c.b16 %v348, %v347
    %v358 = vpack.c.b16 %v350, %v349
    %367 = vmatprep.subr.bf16.mxu0 0
    %368 = vmatpush1.bf16.msra.mxu0 %v351
    %369 = vmatprep.subr.bf16.mxu0 0
    %370 = vmatpush1.bf16.msra.mxu0 %v352
    %371 = vmatprep.subr.bf16.mxu0 0
    %372 = vmatpush1.bf16.msra.mxu0 %v353
    %373 = vmatprep.subr.bf16.mxu0 0
    %374 = vmatpush1.bf16.msra.mxu0 %v354
    %375 = vmatprep.subr.bf16.mxu0 0
    %376 = vmatpush1.bf16.msra.mxu0 %v355
    %377 = vmatprep.subr.bf16.mxu0 0
    %378 = vmatpush1.bf16.msra.mxu0 %v356
    %379 = vmatprep.subr.bf16.mxu0 0
    %380 = vmatpush1.bf16.msra.mxu0 %v357
    %381 = vmatprep.subr.bf16.mxu0 0
    %382 = vmatpush1.bf16.msra.mxu0 %v358
    %383 = vmatprep.subr.bf16.mxu0 0
    %384 = vmatpush1.bf16.msra.mxu0 0
    %385 = vmatprep.subr.bf16.mxu0 0
    %386 = vmatpush1.bf16.msra.mxu0 0
    %387 = vmatprep.subr.bf16.mxu0 0
    %388 = vmatpush1.bf16.msra.mxu0 0
    %389 = vmatprep.subr.bf16.mxu0 0
    %390 = vmatpush1.bf16.msra.mxu0 0
    %391 = vmatprep.subr.bf16.mxu0 0
    %392 = vmatpush1.bf16.msra.mxu0 0
    %393 = vmatprep.subr.bf16.mxu0 0
    %394 = vmatpush1.bf16.msra.mxu0 0
    %395 = vmatprep.subr.bf16.mxu0 0
    %396 = vmatpush1.bf16.msra.mxu0 0
    %397 = vmatprep.subr.bf16.mxu0 0
    %398 = vmatpush1.bf16.msra.mxu0 0
    %399 = vmatprep.mubr.bf16.mxu0 0
    %400 = vmatmul.mubr.bf16.gmra.mrb[0].mxu0 %v295
    %v401 = vpop.f32.mrb[0].mxu0
    %v402 = vadd.f32 %v317, %v401
    %v403 = vpop.f32.mrb[0].mxu0
    %v404 = vpop.f32.mrb[0].mxu0
    %v405 = vpop.f32.mrb[0].mxu0
    %406 = vdwg.mxu0
    %407 = vst [vmem:[#allocation8] sm:$0xff] %v402
    // Predicated region
    $region42: #{_forward.1} parent=1 // pred_check
      _
    $region43: #{_forward.1} parent=1 // pred_check_branch
      %409 = sbr.rel (0) target = $region45
    $region44: #{_forward.1} parent=1 // pred_region
      %s411 = ssub.s32 128, 128
      %412 = vsyncadd [#allocation4], %s411
      %s414 = sshll.u32 [#allocation8], 4
      %s415 = int_to_ptr.vmem [resolvable:$true] %s414
      %417 = dma.vmem_to_hbm [thread:$0]  %s415, 128, %s7, [#allocation4]
    $region45: #{_forward.1} parent=1 // pred_fallthru
      _
    // Predicated region
    $region46: #{_forward.1} parent=1 // pred_check
      _
    $region47: #{_forward.1} parent=1 // pred_check_branch
      %419 = sbr.rel (0) target = $region49
    $region48: #{_forward.1} parent=1 // pred_region
      %420 = dma.done [#allocation4], 128
    $region49: #{_forward.1} parent=1 // pred_fallthru
      _
    %421 = vsyncpa [#allocation3], 1
    %422 = vsyncpa [#allocation6], 1
    %423 = vsyncpa [#allocation4], 1

</llo_original>
